<compile_context>
chip_gen: v6e
topology: v6e:2x2x1
jax: 0.10.0
libtpu: 0.0.40
codegen_flags: <defaults>
</compile_context>

<pallas_src>
import math

import jax
import jax.numpy as jnp
from jax.experimental import pallas as pl
from jax.experimental.pallas import tpu as pltpu


def _fusion_kernel(x_ref, y_ref, wx_ref, wy_ref, b_ref, o_ref, acc_ref):
    """out_tile = sum_k (x_tile @ Wx_tile + y_tile @ Wy_tile) + b_tile."""
    k = pl.program_id(2)

    @pl.when(k == 0)
    def _():
        acc_ref[...] = jnp.zeros_like(acc_ref)

    # Two MXU matmuls per K-step; f32 accumulation regardless of operand dtype.
    acc_ref[...] += jnp.dot(x_ref[...], wx_ref[...],
                            preferred_element_type=jnp.float32)
    acc_ref[...] += jnp.dot(y_ref[...], wy_ref[...],
                            preferred_element_type=jnp.float32)

    @pl.when(k == pl.num_programs(2) - 1)
    def _():
        # Bias add once, in f32, then cast to the output dtype.
        o_ref[...] = (acc_ref[...] + b_ref[...].astype(jnp.float32)
                      ).astype(o_ref.dtype)


def _pick_tile(dim, target, align):
    """Largest tile <= target that is a multiple of `align` and divides `dim`.
    Falls back to the full dimension (always a legal block)."""
    if dim <= target:
        return dim
    t = (target // align) * align
    while t >= align:
        if dim % t == 0:
            return t
        t -= align
    return dim


def fusion_forward(x, y, wx, wy, b, *, compute_dtype=None,
                   tm=512, tn=512, tk=512):
    """Pallas forward for fuse(x, y) = Linear(concat([x, y], -1)).

    x, y : (B, S, H)  float32
    wx   : (H, H_out) float32   (pre-split / pre-transposed weight, 1st half)
    wy   : (H, H_out) float32   (pre-split / pre-transposed weight, 2nd half)
    b    : (H_out,)   float32
    compute_dtype : optional matmul-operand dtype (e.g. jnp.bfloat16);
                    accumulation and bias add stay in f32.
    returns (B, S, H_out) float32
    """
    B, S, H = x.shape
    H_out = wx.shape[1]
    M = B * S
    out_dtype = x.dtype

    x2 = x.reshape(M, H)
    y2 = y.reshape(M, H)
    b2 = b.reshape(1, H_out)

    if compute_dtype is not None and compute_dtype != x2.dtype:
        x2 = x2.astype(compute_dtype)
        y2 = y2.astype(compute_dtype)
        wx = wx.astype(compute_dtype)
        wy = wy.astype(compute_dtype)

    # Tile selection: sublane axis (tm) multiple of 8, lane/contraction axes
    # (tk, tn) multiples of 128 (256-friendly defaults for v6e/v7x MXU).
    tm_ = _pick_tile(M, tm, 8)
    tk_ = _pick_tile(H, tk, 128)
    tn_ = _pick_tile(H_out, tn, 128)

    grid = (pl.cdiv(M, tm_), pl.cdiv(H_out, tn_), pl.cdiv(H, tk_))

    itemsize = jnp.dtype(x2.dtype).itemsize
    cost = pl.CostEstimate(
        flops=2 * M * (2 * H) * H_out,
        transcendentals=0,
        bytes_accessed=(2 * M * H + 2 * H * H_out) * itemsize
        + (M * H_out + H_out) * jnp.dtype(out_dtype).itemsize,
    )

    out2 = pl.pallas_call(
        _fusion_kernel,
        out_shape=jax.ShapeDtypeStruct((M, H_out), out_dtype),
        grid_spec=pltpu.PrefetchScalarGridSpec(
            num_scalar_prefetch=0,
            grid=grid,
            in_specs=[
                pl.BlockSpec((tm_, tk_), lambda i, j, k: (i, k)),   # x
                pl.BlockSpec((tm_, tk_), lambda i, j, k: (i, k)),   # y
                pl.BlockSpec((tk_, tn_), lambda i, j, k: (k, j)),   # Wx
                pl.BlockSpec((tk_, tn_), lambda i, j, k: (k, j)),   # Wy
                pl.BlockSpec((1, tn_), lambda i, j, k: (0, j)),     # bias
            ],
            out_specs=pl.BlockSpec((tm_, tn_), lambda i, j, k: (i, j)),
            scratch_shapes=[pltpu.VMEM((tm_, tn_), jnp.float32)],
        ),
        compiler_params=pltpu.CompilerParams(
            dimension_semantics=("parallel", "parallel", "arbitrary"),
            vmem_limit_bytes=48 << 20,  # safe on v7x (64 MiB) and v5e/v6e
        ),
        cost_estimate=cost,
    )(x2, y2, wx, wy, b2)

    return out2.reshape(B, S, H_out)


def init_params(key, hidden, hidden_out):
    """Deterministic init mirroring BaseFusion._init_weights:
    Linear -> xavier_uniform_ weight (torch layout (H_out, 2H)), zero bias."""
    fan_in = 2 * hidden
    fan_out = hidden_out
    bound = math.sqrt(6.0 / (fan_in + fan_out))
    w = jax.random.uniform(
        key, (hidden_out, 2 * hidden), dtype=jnp.float32,
        minval=-bound, maxval=bound,
    )
    b = jnp.zeros((hidden_out,), dtype=jnp.float32)
    return w, b


def prepare_weights(w, hidden):
    """One-time weight-stationary layout: split torch (H_out, 2H) weight into
    (H, H_out) halves so the forward pass does no per-call transposes."""
    wx = jnp.transpose(w[:, :hidden])   # (H, H_out)
    wy = jnp.transpose(w[:, hidden:])   # (H, H_out)
    return wx, wy


if __name__ == "__main__":
    key = jax.random.PRNGKey(0)
    k_x, k_y, k_w, k_x2, k_y2, k_w2 = jax.random.split(key, 6)

    # --- small shape, f32 path (tight tolerance) -------------------------
    B, S, H = 2, 8, 32
    H_out = 32

    x = jax.random.normal(k_x, (B, S, H), dtype=jnp.float32)
    y = jax.random.normal(k_y, (B, S, H), dtype=jnp.float32)
    w, b = init_params(k_w, H, H_out)
    wx, wy = prepare_weights(w, H)

    out = fusion_forward(x, y, wx, wy, b)
    out = jax.block_until_ready(out)

    ref = jnp.concatenate([x, y], axis=-1) @ w.T + b
    assert out.shape == (B, S, H_out)
    assert jnp.allclose(out, ref, atol=1e-5, rtol=1e-5)

    # --- larger shape, exercises the tiled grid + bf16 MXU path ----------
    B2, S2, H2, H2_out = 4, 256, 512, 512
    x2 = jax.random.normal(k_x2, (B2, S2, H2), dtype=jnp.float32)
    y2 = jax.random.normal(k_y2, (B2, S2, H2), dtype=jnp.float32)
    w2, b2 = init_params(k_w2, H2, H2_out)
    wx2, wy2 = prepare_weights(w2, H2)

    ref2 = jnp.concatenate([x2, y2], axis=-1) @ w2.T + b2

    out2_f32 = jax.block_until_ready(fusion_forward(x2, y2, wx2, wy2, b2))
    assert out2_f32.shape == (B2, S2, H2_out)
    assert jnp.allclose(out2_f32, ref2, atol=1e-4, rtol=1e-4)

    out2_bf16 = jax.block_until_ready(
        fusion_forward(x2, y2, wx2, wy2, b2, compute_dtype=jnp.bfloat16))
    assert out2_bf16.shape == (B2, S2, H2_out)
    assert jnp.allclose(out2_bf16, ref2, atol=5e-2, rtol=5e-2)

    print("KERNEL_OK")
</pallas_src>

<mosaic_0001>
module attributes {stable_mosaic.version = 11 : i64} {
  func.func @_fusion_kernel(%arg0: i32, %arg1: i32, %arg2: i32, %arg3: memref<16x32xf32, #tpu.memory_space<vmem>>, %arg4: memref<16x32xf32, #tpu.memory_space<vmem>>, %arg5: memref<32x32xf32, #tpu.memory_space<vmem>>, %arg6: memref<32x32xf32, #tpu.memory_space<vmem>>, %arg7: memref<1x32xf32, #tpu.memory_space<vmem>>, %arg8: memref<16x32xf32, #tpu.memory_space<vmem>>, %arg9: memref<16x32xf32, #tpu.memory_space<vmem>>) attributes {dimension_semantics = [#tpu.dimension_semantics<parallel>, #tpu.dimension_semantics<parallel>, #tpu.dimension_semantics<arbitrary>], iteration_bounds = array<i64: 1, 1, 1>, scalar_prefetch = 0 : i64, scratch_operands = 1 : i64, tpu.core_type = #tpu.core_type<tc>, window_params = [{transform_indices = @transform_0, window_bounds = array<i64: 16, 32>}, {transform_indices = @transform_1, window_bounds = array<i64: 16, 32>}, {transform_indices = @transform_2, window_bounds = array<i64: 32, 32>}, {transform_indices = @transform_3, window_bounds = array<i64: 32, 32>}, {transform_indices = @transform_4, window_bounds = array<i64: 1, 32>}, {transform_indices = @transform_5, window_bounds = array<i64: 16, 32>}]} {
    %c0_i32 = arith.constant 0 : i32
    %0 = arith.cmpi eq, %arg2, %c0_i32 : i32
    %1 = arith.extui %0 : i1 to i32
    %c0_i32_0 = arith.constant 0 : i32
    %2 = arith.cmpi ne, %1, %c0_i32_0 : i32
    scf.if %2 {
      %cst_19 = arith.constant 0.000000e+00 : f32
      %18 = vector.broadcast %cst_19 : f32 to vector<16x32xf32>
      %c0_20 = arith.constant 0 : index
      %c0_21 = arith.constant 0 : index
      %19 = vector.load %arg9[%c0_20, %c0_21] : memref<16x32xf32, #tpu.memory_space<vmem>>, vector<16x32xf32>
      tpu.vector_store %arg9[%c0_20, %c0_21], %18 {strides = array<i32>} : memref<16x32xf32, #tpu.memory_space<vmem>>, vector<16x32xf32>,
    } else {
    }
    %c0 = arith.constant 0 : index
    %c0_1 = arith.constant 0 : index
    %3 = vector.load %arg9[%c0, %c0_1] : memref<16x32xf32, #tpu.memory_space<vmem>>, vector<16x32xf32>
    %c0_2 = arith.constant 0 : index
    %c0_3 = arith.constant 0 : index
    %4 = vector.load %arg3[%c0_2, %c0_3] : memref<16x32xf32, #tpu.memory_space<vmem>>, vector<16x32xf32>
    %c0_4 = arith.constant 0 : index
    %c0_5 = arith.constant 0 : index
    %5 = vector.load %arg5[%c0_4, %c0_5] : memref<32x32xf32, #tpu.memory_space<vmem>>, vector<32x32xf32>
    %cst = arith.constant dense<0.000000e+00> : vector<16x32xf32>
    %6 = tpu.matmul %4, %5, %cst {dimension_numbers = #tpu.dot_dimension_numbers<[1], [0], [0], [1], [0, 0, 1, 1], [], []>} : vector<16x32xf32>, vector<32x32xf32>, vector<16x32xf32> -> vector<16x32xf32>
    %7 = arith.addf %3, %6 : vector<16x32xf32>
    %c0_6 = arith.constant 0 : index
    %c0_7 = arith.constant 0 : index
    %8 = vector.load %arg9[%c0_6, %c0_7] : memref<16x32xf32, #tpu.memory_space<vmem>>, vector<16x32xf32>
    tpu.vector_store %arg9[%c0_6, %c0_7], %7 {strides = array<i32>} : memref<16x32xf32, #tpu.memory_space<vmem>>, vector<16x32xf32>,
    %c0_8 = arith.constant 0 : index
    %c0_9 = arith.constant 0 : index
    %9 = vector.load %arg9[%c0_8, %c0_9] : memref<16x32xf32, #tpu.memory_space<vmem>>, vector<16x32xf32>
    %c0_10 = arith.constant 0 : index
    %c0_11 = arith.constant 0 : index
    %10 = vector.load %arg4[%c0_10, %c0_11] : memref<16x32xf32, #tpu.memory_space<vmem>>, vector<16x32xf32>
    %c0_12 = arith.constant 0 : index
    %c0_13 = arith.constant 0 : index
    %11 = vector.load %arg6[%c0_12, %c0_13] : memref<32x32xf32, #tpu.memory_space<vmem>>, vector<32x32xf32>
    %cst_14 = arith.constant dense<0.000000e+00> : vector<16x32xf32>
    %12 = tpu.matmul %10, %11, %cst_14 {dimension_numbers = #tpu.dot_dimension_numbers<[1], [0], [0], [1], [0, 0, 1, 1], [], []>} : vector<16x32xf32>, vector<32x32xf32>, vector<16x32xf32> -> vector<16x32xf32>
    %13 = arith.addf %9, %12 : vector<16x32xf32>
    %c0_15 = arith.constant 0 : index
    %c0_16 = arith.constant 0 : index
    %14 = vector.load %arg9[%c0_15, %c0_16] : memref<16x32xf32, #tpu.memory_space<vmem>>, vector<16x32xf32>
    tpu.vector_store %arg9[%c0_15, %c0_16], %13 {strides = array<i32>} : memref<16x32xf32, #tpu.memory_space<vmem>>, vector<16x32xf32>,
    %c0_i32_17 = arith.constant 0 : i32
    %15 = arith.cmpi eq, %arg2, %c0_i32_17 : i32
    %16 = arith.extui %15 : i1 to i32
    %c0_i32_18 = arith.constant 0 : i32
    %17 = arith.cmpi ne, %16, %c0_i32_18 : i32
    scf.if %17 {
      %c0_19 = arith.constant 0 : index
      %c0_20 = arith.constant 0 : index
      %18 = vector.load %arg9[%c0_19, %c0_20] : memref<16x32xf32, #tpu.memory_space<vmem>>, vector<16x32xf32>
      %c0_21 = arith.constant 0 : index
      %c0_22 = arith.constant 0 : index
      %19 = vector.load %arg7[%c0_21, %c0_22] : memref<1x32xf32, #tpu.memory_space<vmem>>, vector<1x32xf32>
      %20 = vector.broadcast %19 : vector<1x32xf32> to vector<16x32xf32>
      %21 = arith.addf %18, %20 : vector<16x32xf32>
      %c0_23 = arith.constant 0 : index
      %c0_24 = arith.constant 0 : index
      %22 = vector.load %arg8[%c0_23, %c0_24] : memref<16x32xf32, #tpu.memory_space<vmem>>, vector<16x32xf32>
      tpu.vector_store %arg8[%c0_23, %c0_24], %21 {strides = array<i32>} : memref<16x32xf32, #tpu.memory_space<vmem>>, vector<16x32xf32>,
    } else {
    }
    return
  }
  func.func @transform_0(%arg0: i32, %arg1: i32, %arg2: i32) -> (i32, i32) {
    %c0_i32 = arith.constant 0 : i32
    return %arg0, %arg2 : i32, i32
  }
  func.func @transform_1(%arg0: i32, %arg1: i32, %arg2: i32) -> (i32, i32) {
    %c0_i32 = arith.constant 0 : i32
    return %arg0, %arg2 : i32, i32
  }
  func.func @transform_2(%arg0: i32, %arg1: i32, %arg2: i32) -> (i32, i32) {
    %c0_i32 = arith.constant 0 : i32
    return %arg2, %arg1 : i32, i32
  }
  func.func @transform_3(%arg0: i32, %arg1: i32, %arg2: i32) -> (i32, i32) {
    %c0_i32 = arith.constant 0 : i32
    return %arg2, %arg1 : i32, i32
  }
  func.func @transform_4(%arg0: i32, %arg1: i32, %arg2: i32) -> (i32, i32) {
    %c0_i32 = arith.constant 0 : i32
    %c0_i32_0 = arith.constant 0 : i32
    return %c0_i32, %arg1 : i32, i32
  }
  func.func @transform_5(%arg0: i32, %arg1: i32, %arg2: i32) -> (i32, i32) {
    %c0_i32 = arith.constant 0 : i32
    return %arg0, %arg1 : i32, i32
  }
}

</mosaic_0001>

<llo_original>
// kernel: tpu_custom_call.1
$region0: #{tpu_custom_call.1}
  #allocation0 [shape = 'u32[]', space=smem, size = 0x4, offset = 0x4, fixed_abs, tag = 'smem constant byte address 0x4 - core index']
  #allocation1 [shape = 'u32[144,128]{1,0:T(1,128)}', space=vmem, size = 0x12000, scoped, tag = 'internal scratch']
  #allocation2 [shape = 'f32[16,32]{1,0:T(8,128)}', space=vmem, size = 0x2000, scoped, tag = 'scratch operand']
  %s0 = inlined_call_operand.hbm [shape: f32[16,32], index: 0, kind: input, shape index: {}]
  %s1 = inlined_call_operand.hbm [shape: f32[16,32], index: 1, kind: input, shape index: {}]
  %s2 = inlined_call_operand.hbm [shape: f32[32,32], index: 2, kind: input, shape index: {}]
  %s3 = inlined_call_operand.hbm [shape: f32[32,32], index: 3, kind: input, shape index: {}]
  %s4 = inlined_call_operand.vmem [shape: f32[1,32], index: 4, kind: input, shape index: {}]
  %s5 = inlined_call_operand.hbm [shape: f32[16,32], index: 5, kind: output, shape index: {}]
  %s6 = sld [smem:[#allocation0]]
  $region54: #{tpu_custom_call.1} parent=0
    _
  %s8 = ssub.s32 1, %s6
  %s9 = scalar_select 0, %s8, %s6
  $region1: #{tpu_custom_call.1} parent=0
    #allocation3 [shape = 'u8[8192]{0}', space=vmem, size = 0x2000, scoped, tag = 'input window, operand 0, single buffered']
    #allocation4 [shape = 's32[1]{0}', space=sflag, size = 0x4, scoped, tag = 'scoped memory for tpu_custom_call.1']
    #allocation5 [shape = 's32[1]{0}', space=sflag, size = 0x4, scoped, tag = 'scoped memory for tpu_custom_call.1']
    #allocation6 [shape = 'u8[8192]{0}', space=vmem, size = 0x2000, scoped, tag = 'input window, operand 1, single buffered']
    #allocation7 [shape = 's32[1]{0}', space=sflag, size = 0x4, scoped, tag = 'scoped memory for tpu_custom_call.1']
    #allocation8 [shape = 'u8[16384]{0}', space=vmem, size = 0x4000, scoped, tag = 'input window, operand 2, single buffered']
    #allocation9 [shape = 'u8[16384]{0}', space=vmem, size = 0x4000, scoped, tag = 'input window, operand 3, single buffered']
    #allocation10 [shape = 's32[1]{0}', space=sflag, size = 0x4, scoped, tag = 'scoped memory for tpu_custom_call.1']
    #allocation11 [shape = 'u8[8192]{0}', space=vmem, size = 0x2000, scoped, tag = 'output window, operand 0, single buffered']
    %10 = vsyncpa [#allocation4], 0
    %11 = vsyncpa [#allocation7], 0
    %12 = vsyncpa [#allocation10], 0
    %13 = vsyncpa [#allocation5], 0
    // Predicated region
    $region2: #{tpu_custom_call.1} parent=1 // pred_check
      _
    $region3: #{tpu_custom_call.1} parent=1 // pred_check_branch
      %15 = sbr.rel (0) target = $region5
    $region4: #{tpu_custom_call.1} parent=1 // pred_region
      %s17 = ssub.s32 256, 256
      %18 = vsyncadd [#allocation4], %s17
      %s19 = sshll.u32 [#allocation3], 4
      %s20 = int_to_ptr.vmem [resolvable:$true] %s19
      %25 = dma.hbm_to_vmem [thread:$0]  %s0, 256, %s20, [#allocation4], 128, 128, 8
    $region5: #{tpu_custom_call.1} parent=1 // pred_fallthru
      _
    // Predicated region
    $region6: #{tpu_custom_call.1} parent=1 // pred_check
      _
    $region7: #{tpu_custom_call.1} parent=1 // pred_check_branch
      %27 = sbr.rel (0) target = $region9
    $region8: #{tpu_custom_call.1} parent=1 // pred_region
      %s29 = ssub.s32 256, 256
      %30 = vsyncadd [#allocation7], %s29
      %s31 = sshll.u32 [#allocation6], 4
      %s32 = int_to_ptr.vmem [resolvable:$true] %s31
      %37 = dma.hbm_to_vmem [thread:$0]  %s1, 256, %s32, [#allocation7], 128, 128, 8
    $region9: #{tpu_custom_call.1} parent=1 // pred_fallthru
      _
    // Predicated region
    $region10: #{tpu_custom_call.1} parent=1 // pred_check
      _
    $region11: #{tpu_custom_call.1} parent=1 // pred_check_branch
      %39 = sbr.rel (0) target = $region13
    $region12: #{tpu_custom_call.1} parent=1 // pred_region
      %s41 = ssub.s32 512, 512
      %42 = vsyncadd [#allocation7], %s41
      %s43 = sshll.u32 [#allocation8], 4
      %s44 = int_to_ptr.vmem [resolvable:$true] %s43
      %49 = dma.hbm_to_vmem [thread:$0]  %s2, 512, %s44, [#allocation7], 128, 128, 8
    $region13: #{tpu_custom_call.1} parent=1 // pred_fallthru
      _
    // Predicated region
    $region14: #{tpu_custom_call.1} parent=1 // pred_check
      _
    $region15: #{tpu_custom_call.1} parent=1 // pred_check_branch
      %51 = sbr.rel (0) target = $region17
    $region16: #{tpu_custom_call.1} parent=1 // pred_region
      %s53 = ssub.s32 512, 512
      %54 = vsyncadd [#allocation10], %s53
      %s55 = sshll.u32 [#allocation9], 4
      %s56 = int_to_ptr.vmem [resolvable:$true] %s55
      %61 = dma.hbm_to_vmem [thread:$0]  %s3, 512, %s56, [#allocation10], 128, 128, 8
    $region17: #{tpu_custom_call.1} parent=1 // pred_fallthru
      _
    // Predicated region
    $region18: #{tpu_custom_call.1} parent=1 // pred_check
      _
    $region19: #{tpu_custom_call.1} parent=1 // pred_check_branch
      %63 = sbr.rel (0) target = $region21
    $region20: #{tpu_custom_call.1} parent=1 // pred_region
      _
    $region21: #{tpu_custom_call.1} parent=1 // pred_fallthru
      _
    // Predicated region
    $region22: #{tpu_custom_call.1} parent=1 // pred_check
      _
    $region23: #{tpu_custom_call.1} parent=1 // pred_check_branch
      %65 = sbr.rel (0) target = $region25
    $region24: #{tpu_custom_call.1} parent=1 // pred_region
      %66 = dma.done [#allocation4], 256
    $region25: #{tpu_custom_call.1} parent=1 // pred_fallthru
      _
    // Predicated region
    $region26: #{tpu_custom_call.1} parent=1 // pred_check
      _
    $region27: #{tpu_custom_call.1} parent=1 // pred_check_branch
      %68 = sbr.rel (0) target = $region29
    $region28: #{tpu_custom_call.1} parent=1 // pred_region
      %69 = dma.done [#allocation7], 256
    $region29: #{tpu_custom_call.1} parent=1 // pred_fallthru
      _
    // Predicated region
    $region30: #{tpu_custom_call.1} parent=1 // pred_check
      _
    $region31: #{tpu_custom_call.1} parent=1 // pred_check_branch
      %71 = sbr.rel (0) target = $region33
    $region32: #{tpu_custom_call.1} parent=1 // pred_region
      %72 = dma.done [#allocation7], 512
    $region33: #{tpu_custom_call.1} parent=1 // pred_fallthru
      _
    // Predicated region
    $region34: #{tpu_custom_call.1} parent=1 // pred_check
      _
    $region35: #{tpu_custom_call.1} parent=1 // pred_check_branch
      %74 = sbr.rel (0) target = $region37
    $region36: #{tpu_custom_call.1} parent=1 // pred_region
      %75 = dma.done [#allocation10], 512
    $region37: #{tpu_custom_call.1} parent=1 // pred_fallthru
      _
    %p76 = scmp.eq.s32.totalorder 0, 0
    // Predicated region
    $region38: #{tpu_custom_call.1} parent=1 // pred_check
      %p77 = pneg %p76
    $region39: #{tpu_custom_call.1} parent=1 // pred_check_branch
      %79 = sbr.rel (%p77) target = $region41
    $region40: #{tpu_custom_call.1} parent=1 // pred_region
      %vm80 = vcmask 261120
      %81 = vst.msk [vmem:[#allocation2] sm:$0xff] %vm80, 0.0
      %82 = vst.msk [vmem:[#allocation2 + $0x8] sm:$0xff] %vm80, 0.0
    $region41: #{tpu_custom_call.1} parent=1 // pred_fallthru
      _
    %v83 = vld [vmem:[#allocation2] sm:$0xff]
    %v84 = vld [vmem:[#allocation2 + $0x8] sm:$0xff]
    %v85 = vld [vmem:[#allocation3] sm:$0xff]
    %v86 = vld [vmem:[#allocation3 + $0x8] sm:$0xff]
    %v87 = vld [vmem:[#allocation8] sm:$0xff]
    %v88 = vld [vmem:[#allocation8 + $0x8] sm:$0xff]
    %v89 = vld [vmem:[#allocation8 + $0x10] sm:$0xff]
    %v90 = vld [vmem:[#allocation8 + $0x18] sm:$0xff]
    %vm91 = vcmask 261120
    %v93 = vsel %vm91, %v85, 0
    %v96 = vsel %vm91, %v86, 0
    %98 = vmatprep.subr.mxu0 0.0
    %99 = vmatpush1.msra.mxu0 0.0
    %100 = vmatprep.subr.mxu0 0.0
    %101 = vmatpush1.msra.mxu0 0.0
    %102 = vmatprep.subr.mxu0 0.0
    %103 = vmatpush1.msra.mxu0 0.0
    %104 = vmatprep.subr.mxu0 0.0
    %105 = vmatpush1.msra.mxu0 0.0
    %106 = vmatprep.subr.mxu0 0.0
    %107 = vmatpush1.msra.mxu0 0.0
    %108 = vmatprep.subr.mxu0 0.0
    %109 = vmatpush1.msra.mxu0 0.0
    %110 = vmatprep.subr.mxu0 0.0
    %111 = vmatpush1.msra.mxu0 0.0
    %112 = vmatprep.subr.mxu0 0.0
    %113 = vmatpush1.msra.mxu0 0.0
    %114 = vmatprep.subr.mxu0 0.0
    %115 = vmatpush1.msra.mxu0 0.0
    %116 = vmatprep.subr.mxu0 0.0
    %117 = vmatpush1.msra.mxu0 0.0
    %118 = vmatprep.subr.mxu0 0.0
    %119 = vmatpush1.msra.mxu0 0.0
    %120 = vmatprep.subr.mxu0 0.0
    %121 = vmatpush1.msra.mxu0 0.0
    %122 = vmatprep.subr.mxu0 0.0
    %123 = vmatpush1.msra.mxu0 %v90
    %124 = vmatprep.subr.mxu0 0.0
    %125 = vmatpush1.msra.mxu0 %v89
    %126 = vmatprep.subr.mxu0 0.0
    %127 = vmatpush1.msra.mxu0 %v88
    %128 = vmatprep.subr.mxu0 0.0
    %129 = vmatpush1.msra.mxu0 %v87
    %130 = vmatprep.subr.mxu0 0.0
    %131 = vmatpush2.msra.mxu0 0.0
    %132 = vmatprep.subr.mxu0 0.0
    %133 = vmatpush2.msra.mxu0 0.0
    %134 = vmatprep.subr.mxu0 0.0
    %135 = vmatpush2.msra.mxu0 0.0
    %136 = vmatprep.subr.mxu0 0.0
    %137 = vmatpush2.msra.mxu0 0.0
    %138 = vmatprep.subr.mxu0 0.0
    %139 = vmatpush2.msra.mxu0 0.0
    %140 = vmatprep.subr.mxu0 0.0
    %141 = vmatpush2.msra.mxu0 0.0
    %142 = vmatprep.subr.mxu0 0.0
    %143 = vmatpush2.msra.mxu0 0.0
    %144 = vmatprep.subr.mxu0 0.0
    %145 = vmatpush2.msra.mxu0 0.0
    %146 = vmatprep.subr.mxu0 0.0
    %147 = vmatpush2.msra.mxu0 0.0
    %148 = vmatprep.subr.mxu0 0.0
    %149 = vmatpush2.msra.mxu0 0.0
    %150 = vmatprep.subr.mxu0 0.0
    %151 = vmatpush2.msra.mxu0 0.0
    %152 = vmatprep.subr.mxu0 0.0
    %153 = vmatpush2.msra.mxu0 0.0
    %154 = vmatprep.subr.mxu0 0.0
    %155 = vmatpush2.msra.mxu0 0.0
    %156 = vmatprep.subr.mxu0 0.0
    %157 = vmatpush2.msra.mxu0 0.0
    %158 = vmatprep.subr.mxu0 0.0
    %159 = vmatpush2.msra.mxu0 0.0
    %160 = vmatprep.subr.mxu0 0.0
    %161 = vmatpush2.msra.mxu0 0.0
    %162 = vmatprep.mubr.f32.mxu0 0.0
    %163 = vmatmul.mubr.f32.gmra.mxu0 %v93
    %v164 = vpop.f32.mrf.mxu0
    %v165 = vadd.f32 0.0, %v164
    %v166 = vpop.f32.mrf.mxu0
    %167 = vmatprep.mubr.f32.mxu0 0.0
    %168 = vmatmul.mubr.f32.gmra.mxu0 %v96
    %v169 = vpop.f32.mrf.mxu0
    %v170 = vadd.f32 0.0, %v169
    %v171 = vpop.f32.mrf.mxu0
    %172 = vdwg.mxu0
    %v173 = vadd.f32 %v83, %v165
    %v174 = vadd.f32 %v84, %v170
    %175 = vst.msk [vmem:[#allocation2] sm:$0xff] %vm91, %v173
    %176 = vst.msk [vmem:[#allocation2 + $0x8] sm:$0xff] %vm91, %v174
    %v177 = vld [vmem:[#allocation2] sm:$0xff]
    %v178 = vld [vmem:[#allocation2 + $0x8] sm:$0xff]
    %v179 = vld [vmem:[#allocation6] sm:$0xff]
    %v180 = vld [vmem:[#allocation6 + $0x8] sm:$0xff]
    %v181 = vld [vmem:[#allocation9] sm:$0xff]
    %v182 = vld [vmem:[#allocation9 + $0x8] sm:$0xff]
    %v183 = vld [vmem:[#allocation9 + $0x10] sm:$0xff]
    %v184 = vld [vmem:[#allocation9 + $0x18] sm:$0xff]
    %v186 = vsel %vm91, %v179, 0
    %v189 = vsel %vm91, %v180, 0
    %191 = vmatprep.subr.mxu0 0.0
    %192 = vmatpush1.msra.mxu0 0.0
    %193 = vmatprep.subr.mxu0 0.0
    %194 = vmatpush1.msra.mxu0 0.0
    %195 = vmatprep.subr.mxu0 0.0
    %196 = vmatpush1.msra.mxu0 0.0
    %197 = vmatprep.subr.mxu0 0.0
    %198 = vmatpush1.msra.mxu0 0.0
    %199 = vmatprep.subr.mxu0 0.0
    %200 = vmatpush1.msra.mxu0 0.0
    %201 = vmatprep.subr.mxu0 0.0
    %202 = vmatpush1.msra.mxu0 0.0
    %203 = vmatprep.subr.mxu0 0.0
    %204 = vmatpush1.msra.mxu0 0.0
    %205 = vmatprep.subr.mxu0 0.0
    %206 = vmatpush1.msra.mxu0 0.0
    %207 = vmatprep.subr.mxu0 0.0
    %208 = vmatpush1.msra.mxu0 0.0
    %209 = vmatprep.subr.mxu0 0.0
    %210 = vmatpush1.msra.mxu0 0.0
    %211 = vmatprep.subr.mxu0 0.0
    %212 = vmatpush1.msra.mxu0 0.0
    %213 = vmatprep.subr.mxu0 0.0
    %214 = vmatpush1.msra.mxu0 0.0
    %215 = vmatprep.subr.mxu0 0.0
    %216 = vmatpush1.msra.mxu0 %v184
    %217 = vmatprep.subr.mxu0 0.0
    %218 = vmatpush1.msra.mxu0 %v183
    %219 = vmatprep.subr.mxu0 0.0
    %220 = vmatpush1.msra.mxu0 %v182
    %221 = vmatprep.subr.mxu0 0.0
    %222 = vmatpush1.msra.mxu0 %v181
    %223 = vmatprep.subr.mxu0 0.0
    %224 = vmatpush2.msra.mxu0 0.0
    %225 = vmatprep.subr.mxu0 0.0
    %226 = vmatpush2.msra.mxu0 0.0
    %227 = vmatprep.subr.mxu0 0.0
    %228 = vmatpush2.msra.mxu0 0.0
    %229 = vmatprep.subr.mxu0 0.0
    %230 = vmatpush2.msra.mxu0 0.0
    %231 = vmatprep.subr.mxu0 0.0
    %232 = vmatpush2.msra.mxu0 0.0
    %233 = vmatprep.subr.mxu0 0.0
    %234 = vmatpush2.msra.mxu0 0.0
    %235 = vmatprep.subr.mxu0 0.0
    %236 = vmatpush2.msra.mxu0 0.0
    %237 = vmatprep.subr.mxu0 0.0
    %238 = vmatpush2.msra.mxu0 0.0
    %239 = vmatprep.subr.mxu0 0.0
    %240 = vmatpush2.msra.mxu0 0.0
    %241 = vmatprep.subr.mxu0 0.0
    %242 = vmatpush2.msra.mxu0 0.0
    %243 = vmatprep.subr.mxu0 0.0
    %244 = vmatpush2.msra.mxu0 0.0
    %245 = vmatprep.subr.mxu0 0.0
    %246 = vmatpush2.msra.mxu0 0.0
    %247 = vmatprep.subr.mxu0 0.0
    %248 = vmatpush2.msra.mxu0 0.0
    %249 = vmatprep.subr.mxu0 0.0
    %250 = vmatpush2.msra.mxu0 0.0
    %251 = vmatprep.subr.mxu0 0.0
    %252 = vmatpush2.msra.mxu0 0.0
    %253 = vmatprep.subr.mxu0 0.0
    %254 = vmatpush2.msra.mxu0 0.0
    %255 = vmatprep.mubr.f32.mxu0 0.0
    %256 = vmatmul.mubr.f32.gmra.mxu0 %v186
    %v257 = vpop.f32.mrf.mxu0
    %v258 = vadd.f32 0.0, %v257
    %v259 = vpop.f32.mrf.mxu0
    %260 = vmatprep.mubr.f32.mxu0 0.0
    %261 = vmatmul.mubr.f32.gmra.mxu0 %v189
    %v262 = vpop.f32.mrf.mxu0
    %v263 = vadd.f32 0.0, %v262
    %v264 = vpop.f32.mrf.mxu0
    %265 = vdwg.mxu0
    %v266 = vadd.f32 %v177, %v258
    %v267 = vadd.f32 %v178, %v263
    %268 = vst.msk [vmem:[#allocation2] sm:$0xff] %vm91, %v266
    %269 = vst.msk [vmem:[#allocation2 + $0x8] sm:$0xff] %vm91, %v267
    // Predicated region
    $region42: #{tpu_custom_call.1} parent=1 // pred_check
      %p270 = pneg %p76
    $region43: #{tpu_custom_call.1} parent=1 // pred_check_branch
      %272 = sbr.rel (%p270) target = $region45
    $region44: #{tpu_custom_call.1} parent=1 // pred_region
      %v273 = vld [vmem:[#allocation2] sm:$0xff]
      %v274 = vld [vmem:[#allocation2 + $0x8] sm:$0xff]
      %v275 = vld [vmem:[%s4] sm:$0x1]
      %v277 = vlaneseq
      %v278 = vshrl.u32 %v277, 7
      %v279 = vsub.s32 0, %v278
      %v280 = vrot.slane %v275, %v279
      %v282 = vadd.f32 %v273, %v280
      %v283 = vadd.f32 %v274, %v280
      %284 = vst.msk [vmem:[#allocation11] sm:$0xff] %vm91, %v282
      %285 = vst.msk [vmem:[#allocation11 + $0x8] sm:$0xff] %vm91, %v283
    $region45: #{tpu_custom_call.1} parent=1 // pred_fallthru
      _
    // Predicated region
    $region46: #{tpu_custom_call.1} parent=1 // pred_check
      _
    $region47: #{tpu_custom_call.1} parent=1 // pred_check_branch
      %287 = sbr.rel (0) target = $region49
    $region48: #{tpu_custom_call.1} parent=1 // pred_region
      %s289 = ssub.s32 256, 256
      %290 = vsyncadd [#allocation5], %s289
      %s291 = sshll.u32 [#allocation11], 4
      %s292 = int_to_ptr.vmem [resolvable:$true] %s291
      %297 = dma.vmem_to_hbm [thread:$0]  %s292, 256, %s5, [#allocation5], 128, 128, 8
    $region49: #{tpu_custom_call.1} parent=1 // pred_fallthru
      _
    // Predicated region
    $region50: #{tpu_custom_call.1} parent=1 // pred_check
      _
    $region51: #{tpu_custom_call.1} parent=1 // pred_check_branch
      %299 = sbr.rel (0) target = $region53
    $region52: #{tpu_custom_call.1} parent=1 // pred_region
      %300 = dma.done [#allocation5], 256
    $region53: #{tpu_custom_call.1} parent=1 // pred_fallthru
      _
    %301 = vsyncpa [#allocation4], 1
    %302 = vsyncpa [#allocation7], 1
    %303 = vsyncpa [#allocation10], 1
    %304 = vsyncpa [#allocation5], 1

</llo_original>
